<compile_context>
chip_gen: v7x
topology: tpu7x:2x2x1
jax: 0.10.0
libtpu: 0.0.40
codegen_flags: <defaults>
</compile_context>

<pallas_src>
import jax
import jax.numpy as jnp
from jax.experimental import pallas as pl
from jax.experimental.pallas import tpu as pltpu

IN_FEATURES = 640
HIDDEN = 256


def _round_up(n, m):
    return (n + m - 1) // m * m


def critic_kernel(x_ref, w1_ref, b1_ref, w2_ref, b2_ref, o_ref):
    # x_ref:  [Bt, 640] bf16     w1_ref: [640, 256] bf16
    # b1_ref: [1, 256]  f32      w2_ref: [1, 256]  f32     b2_ref: [1, 1] f32 (SMEM)
    # o_ref:  [Bt, 1]   f32
    # Layer 1 on the MXU, f32 accumulation.
    h = jnp.dot(x_ref[...], w1_ref[...], preferred_element_type=jnp.float32)
    h = jnp.maximum(h + b1_ref[...], 0.0)              # bias + ReLU in f32 (VPU)
    # Layer 2 (256 -> 1): VPU multiply + XLU lane reduction (avoids N=1 MXU shape).
    v = jnp.sum(h * w2_ref[...], axis=-1, keepdims=True)
    o_ref[...] = (v + b2_ref[0, 0]).astype(o_ref.dtype)


def critic_forward(x, w1, b1, w2_row, b2, *, block_b=1024):
    """x: [B, 640] f32, w1: [640, 256], b1: [1, 256], w2_row: [1, 256], b2: [1, 1]."""
    B, F = x.shape
    assert F == IN_FEATURES
    # Batch tile: multiple of 16 (bf16 sublane packing), capped at block_b.
    Bt = min(block_b, _round_up(B, 16))
    Bp = _round_up(B, Bt)

    # Cast the streamed/matmul operands to bf16 (MXU-native, halves HBM traffic).
    x_bf = x.astype(jnp.bfloat16)
    w1_bf = w1.astype(jnp.bfloat16)
    if Bp != B:
        x_bf = jnp.pad(x_bf, ((0, Bp - B), (0, 0)))

    out = pl.pallas_call(
        critic_kernel,
        out_shape=jax.ShapeDtypeStruct((Bp, 1), jnp.float32),
        grid=(Bp // Bt,),
        in_specs=[
            pl.BlockSpec((Bt, IN_FEATURES), lambda i: (i, 0)),      # x: streamed tiles
            pl.BlockSpec((IN_FEATURES, HIDDEN), lambda i: (0, 0)),  # w1: resident
            pl.BlockSpec((1, HIDDEN), lambda i: (0, 0)),            # b1: resident
            pl.BlockSpec((1, HIDDEN), lambda i: (0, 0)),            # w2 row: resident
            pl.BlockSpec(memory_space=pltpu.SMEM),                  # b2 scalar in SMEM
        ],
        out_specs=pl.BlockSpec((Bt, 1), lambda i: (i, 0)),
        compiler_params=pltpu.CompilerParams(
            dimension_semantics=("parallel",),
        ),
    )(x_bf, w1_bf, b1, w2_row, b2)
    return out[:B]


def init_params(key):
    # Mimics nn.Linear default init: U(-1/sqrt(fan_in), 1/sqrt(fan_in)).
    k1, k2, k3, k4 = jax.random.split(key, 4)
    bound1 = 1.0 / jnp.sqrt(float(IN_FEATURES))
    bound2 = 1.0 / jnp.sqrt(float(HIDDEN))
    # w1 stored as [in, out] (transposed vs PyTorch's [out, in]); w2 as a [1, 256] row.
    w1 = jax.random.uniform(k1, (IN_FEATURES, HIDDEN), jnp.float32, -bound1, bound1)
    b1 = jax.random.uniform(k2, (1, HIDDEN), jnp.float32, -bound1, bound1)
    w2_row = jax.random.uniform(k3, (1, HIDDEN), jnp.float32, -bound2, bound2)
    b2 = jax.random.uniform(k4, (1, 1), jnp.float32, -bound2, bound2)
    return w1, b1, w2_row, b2


def _reference(x, w1, b1, w2_row, b2):
    # Same bf16 rounding of x/w1 as the kernel, f32 accumulation / elementwise.
    h = jnp.dot(x.astype(jnp.bfloat16), w1.astype(jnp.bfloat16),
                preferred_element_type=jnp.float32)
    h = jnp.maximum(h + b1, 0.0)
    return jnp.sum(h * w2_row, axis=-1, keepdims=True) + b2[0, 0]


if __name__ == "__main__":
    key = jax.random.PRNGKey(0)
    kx, kp, kx2 = jax.random.split(key, 3)
    w1, b1, w2_row, b2 = init_params(kp)

    # Small aligned batch.
    B = 8
    x = jax.random.normal(kx, (B, IN_FEATURES), jnp.float32)
    out = jax.block_until_ready(critic_forward(x, w1, b1, w2_row, b2))
    ref = _reference(x, w1, b1, w2_row, b2)
    assert out.shape == (B, 1)
    assert jnp.allclose(out, ref, atol=2e-3, rtol=2e-3)

    # Batch not divisible by the tile (exercises the padding/tail path).
    B2 = 50
    x2 = jax.random.normal(kx2, (B2, IN_FEATURES), jnp.float32)
    out2 = jax.block_until_ready(critic_forward(x2, w1, b1, w2_row, b2))
    ref2 = _reference(x2, w1, b1, w2_row, b2)
    assert out2.shape == (B2, 1)
    assert jnp.allclose(out2, ref2, atol=2e-3, rtol=2e-3)

    print("KERNEL_OK")
</pallas_src>

<mosaic_0001>
module attributes {stable_mosaic.version = 11 : i64} {
  func.func @critic_kernel(%arg0: i32, %arg1: memref<16x640xbf16, #tpu.memory_space<vmem>>, %arg2: memref<640x256xbf16, #tpu.memory_space<vmem>>, %arg3: memref<1x256xf32, #tpu.memory_space<vmem>>, %arg4: memref<1x256xf32, #tpu.memory_space<vmem>>, %arg5: memref<1x1xf32, #tpu.memory_space<smem>>, %arg6: memref<16x1xf32, #tpu.memory_space<vmem>>) attributes {dimension_semantics = [#tpu.dimension_semantics<parallel>], iteration_bounds = array<i64: 1>, scalar_prefetch = 0 : i64, scratch_operands = 0 : i64, tpu.core_type = #tpu.core_type<tc>, window_params = [{transform_indices = @transform_0, window_bounds = array<i64: 16, 640>}, {pipeline_mode = #tpu.pipeline_mode<synchronous>, transform_indices = @transform_1, window_bounds = array<i64: 640, 256>}, {pipeline_mode = #tpu.pipeline_mode<synchronous>, transform_indices = @transform_2, window_bounds = array<i64: 1, 256>}, {pipeline_mode = #tpu.pipeline_mode<synchronous>, transform_indices = @transform_3, window_bounds = array<i64: 1, 256>}, {transform_indices = @transform_4, window_bounds = array<i64: 1, 1>}, {transform_indices = @transform_5, window_bounds = array<i64: 16, 1>}]} {
    %c0 = arith.constant 0 : index
    %c0_0 = arith.constant 0 : index
    %0 = vector.load %arg1[%c0, %c0_0] : memref<16x640xbf16, #tpu.memory_space<vmem>>, vector<16x640xbf16>
    %c0_1 = arith.constant 0 : index
    %c0_2 = arith.constant 0 : index
    %1 = vector.load %arg2[%c0_1, %c0_2] : memref<640x256xbf16, #tpu.memory_space<vmem>>, vector<640x256xbf16>
    %cst = arith.constant dense<0.000000e+00> : vector<16x256xf32>
    %2 = tpu.matmul %0, %1, %cst {dimension_numbers = #tpu.dot_dimension_numbers<[1], [0], [0], [1], [0, 0, 1, 1], [], []>} : vector<16x640xbf16>, vector<640x256xbf16>, vector<16x256xf32> -> vector<16x256xf32>
    %c0_3 = arith.constant 0 : index
    %c0_4 = arith.constant 0 : index
    %3 = vector.load %arg3[%c0_3, %c0_4] : memref<1x256xf32, #tpu.memory_space<vmem>>, vector<1x256xf32>
    %4 = vector.broadcast %3 : vector<1x256xf32> to vector<16x256xf32>
    %5 = arith.addf %2, %4 : vector<16x256xf32>
    %cst_5 = arith.constant 0.000000e+00 : f32
    %6 = vector.broadcast %cst_5 : f32 to vector<16x256xf32>
    %7 = arith.maximumf %5, %6 : vector<16x256xf32>
    %c0_6 = arith.constant 0 : index
    %c0_7 = arith.constant 0 : index
    %8 = vector.load %arg4[%c0_6, %c0_7] : memref<1x256xf32, #tpu.memory_space<vmem>>, vector<1x256xf32>
    %9 = vector.broadcast %8 : vector<1x256xf32> to vector<16x256xf32>
    %10 = arith.mulf %7, %9 : vector<16x256xf32>
    %cst_8 = arith.constant dense<0.000000e+00> : vector<16xf32>
    %11 = vector.multi_reduction <add>, %10, %cst_8 [1] : vector<16x256xf32> to vector<16xf32>
    %12 = vector.shape_cast %11 : vector<16xf32> to vector<16x1xf32>
    %c0_9 = arith.constant 0 : index
    %c0_10 = arith.constant 0 : index
    %13 = memref.load %arg5[%c0_9, %c0_10] : memref<1x1xf32, #tpu.memory_space<smem>>
    %14 = vector.broadcast %13 : f32 to vector<16x1xf32>
    %15 = arith.addf %12, %14 : vector<16x1xf32>
    %c0_11 = arith.constant 0 : index
    %c0_12 = arith.constant 0 : index
    %16 = vector.load %arg6[%c0_11, %c0_12] : memref<16x1xf32, #tpu.memory_space<vmem>>, vector<16x1xf32>
    tpu.vector_store %arg6[%c0_11, %c0_12], %15 {strides = array<i32>} : memref<16x1xf32, #tpu.memory_space<vmem>>, vector<16x1xf32>,
    return
  }
  func.func @transform_0(%arg0: i32) -> (i32, i32) {
    %c0_i32 = arith.constant 0 : i32
    %c0_i32_0 = arith.constant 0 : i32
    return %arg0, %c0_i32 : i32, i32
  }
  func.func @transform_1(%arg0: i32) -> (i32, i32) {
    %c0_i32 = arith.constant 0 : i32
    %c0_i32_0 = arith.constant 0 : i32
    %c0_i32_1 = arith.constant 0 : i32
    return %c0_i32, %c0_i32_0 : i32, i32
  }
  func.func @transform_2(%arg0: i32) -> (i32, i32) {
    %c0_i32 = arith.constant 0 : i32
    %c0_i32_0 = arith.constant 0 : i32
    %c0_i32_1 = arith.constant 0 : i32
    return %c0_i32, %c0_i32_0 : i32, i32
  }
  func.func @transform_3(%arg0: i32) -> (i32, i32) {
    %c0_i32 = arith.constant 0 : i32
    %c0_i32_0 = arith.constant 0 : i32
    %c0_i32_1 = arith.constant 0 : i32
    return %c0_i32, %c0_i32_0 : i32, i32
  }
  func.func @transform_4(%arg0: i32) -> (i32, i32) {
    %c0_i32 = arith.constant 0 : i32
    %c0_i32_0 = arith.constant 0 : i32
    %c0_i32_1 = arith.constant 0 : i32
    return %c0_i32, %c0_i32_0 : i32, i32
  }
  func.func @transform_5(%arg0: i32) -> (i32, i32) {
    %c0_i32 = arith.constant 0 : i32
    %c0_i32_0 = arith.constant 0 : i32
    return %arg0, %c0_i32 : i32, i32
  }
}

</mosaic_0001>

<llo_original>
// kernel: tpu_custom_call.1
$region0: #{tpu_custom_call.1}
  #allocation0 [shape = 'u32[]', space=smem, size = 0x4, offset = 0x4, fixed_abs, tag = 'smem constant byte address 0x4 - core index']
  #allocation1 [shape = 'u32[144,128]{1,0:T(1,128)}', space=vmem, size = 0x12000, scoped, tag = 'internal scratch']
  #allocation2 [shape = 'f32[1,1]{1,0:T(1,128)S(6)}', space=smem, size = 0x200, scoped, tag = 'scoped memory for tpu_custom_call.1']
  %s0 = inlined_call_operand.hbm [shape: bf16[16,640], index: 0, kind: input, shape index: {}]
  %s1 = inlined_call_operand.hbm [shape: bf16[640,256], index: 1, kind: input, shape index: {}]
  %s2 = inlined_call_operand.vmem [shape: f32[1,256], index: 2, kind: input, shape index: {}]
  %s3 = inlined_call_operand.vmem [shape: f32[1,256], index: 3, kind: input, shape index: {}]
  %s4 = inlined_call_operand.<no memory space> [shape: f32[1,1], index: 4, kind: input, shape index: {}]
  %s5 = inlined_call_operand.vmem [shape: f32[16,1], index: 5, kind: output, shape index: {}]
  %s6 = sld [smem:[#allocation0]]
  $region38: #{tpu_custom_call.1} parent=0
    _
  %s8 = ssub.s32 1, %s6
  %s9 = scalar_select 0, %s8, %s6
  %10 = sst [smem:[#allocation2]] %s4
  $region1: #{tpu_custom_call.1} parent=0
    #allocation3 [shape = 'u8[20480]{0}', space=vmem, size = 0x5000, scoped, tag = 'input window, operand 0, single buffered']
    #allocation4 [shape = 's32[1]{0}', space=sflag, size = 0x4, scoped, tag = 'scoped memory for tpu_custom_call.1']
    #allocation5 [shape = 'u8[327680]{0}', space=vmem, size = 0x50000, scoped, tag = 'input window, operand 1, single buffered']
    #allocation6 [shape = 's32[1]{0}', space=sflag, size = 0x4, scoped, tag = 'scoped memory for tpu_custom_call.1']
    %11 = vsyncpa [#allocation4], 0
    %12 = vsyncpa [#allocation6], 0
    // Predicated region
    $region2: #{tpu_custom_call.1} parent=1 // pred_check
      _
    $region3: #{tpu_custom_call.1} parent=1 // pred_check_branch
      %14 = sbr.rel (0) target = $region5
    $region4: #{tpu_custom_call.1} parent=1 // pred_region
      %s16 = ssub.s32 640, 640
      %17 = vsyncadd [#allocation4], %s16
      %s18 = sshll.u32 [#allocation3], 4
      %s19 = int_to_ptr.vmem [resolvable:$true] %s18
      %24 = dma.hbm_to_vmem [thread:$0]  %s0, 640, %s19, [#allocation4], 320, 320, 20
    $region5: #{tpu_custom_call.1} parent=1 // pred_fallthru
      _
    // Predicated region
    $region6: #{tpu_custom_call.1} parent=1 // pred_check
      _
    $region7: #{tpu_custom_call.1} parent=1 // pred_check_branch
      %26 = sbr.rel (0) target = $region9
    $region8: #{tpu_custom_call.1} parent=1 // pred_region
      %s28 = ssub.s32 10240, 10240
      %29 = vsyncadd [#allocation6], %s28
      %s30 = sshll.u32 [#allocation5], 4
      %s31 = int_to_ptr.vmem [resolvable:$true] %s30
      %36 = dma.hbm_to_vmem [thread:$0]  %s1, 10240, %s31, [#allocation6], 128, 128, 8
    $region9: #{tpu_custom_call.1} parent=1 // pred_fallthru
      _
    // Predicated region
    $region10: #{tpu_custom_call.1} parent=1 // pred_check
      _
    $region11: #{tpu_custom_call.1} parent=1 // pred_check_branch
      %38 = sbr.rel (0) target = $region13
    $region12: #{tpu_custom_call.1} parent=1 // pred_region
      _
    $region13: #{tpu_custom_call.1} parent=1 // pred_fallthru
      _
    // Predicated region
    $region14: #{tpu_custom_call.1} parent=1 // pred_check
      _
    $region15: #{tpu_custom_call.1} parent=1 // pred_check_branch
      %40 = sbr.rel (0) target = $region17
    $region16: #{tpu_custom_call.1} parent=1 // pred_region
      _
    $region17: #{tpu_custom_call.1} parent=1 // pred_fallthru
      _
    // Predicated region
    $region18: #{tpu_custom_call.1} parent=1 // pred_check
      _
    $region19: #{tpu_custom_call.1} parent=1 // pred_check_branch
      %42 = sbr.rel (0) target = $region21
    $region20: #{tpu_custom_call.1} parent=1 // pred_region
      _
    $region21: #{tpu_custom_call.1} parent=1 // pred_fallthru
      _
    // Predicated region
    $region22: #{tpu_custom_call.1} parent=1 // pred_check
      _
    $region23: #{tpu_custom_call.1} parent=1 // pred_check_branch
      %44 = sbr.rel (0) target = $region25
    $region24: #{tpu_custom_call.1} parent=1 // pred_region
      %45 = dma.done [#allocation4], 640
    $region25: #{tpu_custom_call.1} parent=1 // pred_fallthru
      _
    // Predicated region
    $region26: #{tpu_custom_call.1} parent=1 // pred_check
      _
    $region27: #{tpu_custom_call.1} parent=1 // pred_check_branch
      %47 = sbr.rel (0) target = $region29
    $region28: #{tpu_custom_call.1} parent=1 // pred_region
      %48 = dma.done [#allocation6], 10240
    $region29: #{tpu_custom_call.1} parent=1 // pred_fallthru
      _
    %v50 = vld [vmem:[#allocation3] sm:$0xff]
    %v51 = vld [vmem:[#allocation3 + $0x8] sm:$0xff]
    %v52 = vld [vmem:[#allocation3 + $0x10] sm:$0xf]
    %v53 = vld [vmem:[#allocation3 + $0x14] sm:$0xff]
    %v54 = vld [vmem:[#allocation3 + $0x1c] sm:$0xff]
    %v55 = vld [vmem:[#allocation3 + $0x24] sm:$0xf]
    %v56 = vld [vmem:[#allocation5] sm:$0xff]
    %v57 = vld [vmem:[#allocation5 + $0x8] sm:$0xff]
    %v58 = vld [vmem:[#allocation5 + $0x10] sm:$0xff]
    %v59 = vld [vmem:[#allocation5 + $0x18] sm:$0xff]
    %v60 = vld [vmem:[#allocation5 + $0x20] sm:$0xff]
    %v61 = vld [vmem:[#allocation5 + $0x28] sm:$0xff]
    %v62 = vld [vmem:[#allocation5 + $0x30] sm:$0xff]
    %v63 = vld [vmem:[#allocation5 + $0x38] sm:$0xff]
    %v64 = vld [vmem:[#allocation5 + $0x40] sm:$0xff]
    %v65 = vld [vmem:[#allocation5 + $0x48] sm:$0xff]
    %v66 = vld [vmem:[#allocation5 + $0x50] sm:$0xff]
    %v67 = vld [vmem:[#allocation5 + $0x58] sm:$0xff]
    %v68 = vld [vmem:[#allocation5 + $0x60] sm:$0xff]
    %v69 = vld [vmem:[#allocation5 + $0x68] sm:$0xff]
    %v70 = vld [vmem:[#allocation5 + $0x70] sm:$0xff]
    %v71 = vld [vmem:[#allocation5 + $0x78] sm:$0xff]
    %v72 = vld [vmem:[#allocation5 + $0x80] sm:$0xff]
    %v73 = vld [vmem:[#allocation5 + $0x88] sm:$0xff]
    %v74 = vld [vmem:[#allocation5 + $0x90] sm:$0xff]
    %v75 = vld [vmem:[#allocation5 + $0x98] sm:$0xff]
    %v76 = vld [vmem:[#allocation5 + $0xa0] sm:$0xff]
    %v77 = vld [vmem:[#allocation5 + $0xa8] sm:$0xff]
    %v78 = vld [vmem:[#allocation5 + $0xb0] sm:$0xff]
    %v79 = vld [vmem:[#allocation5 + $0xb8] sm:$0xff]
    %v80 = vld [vmem:[#allocation5 + $0xc0] sm:$0xff]
    %v81 = vld [vmem:[#allocation5 + $0xc8] sm:$0xff]
    %v82 = vld [vmem:[#allocation5 + $0xd0] sm:$0xff]
    %v83 = vld [vmem:[#allocation5 + $0xd8] sm:$0xff]
    %v84 = vld [vmem:[#allocation5 + $0xe0] sm:$0xff]
    %v85 = vld [vmem:[#allocation5 + $0xe8] sm:$0xff]
    %v86 = vld [vmem:[#allocation5 + $0xf0] sm:$0xff]
    %v87 = vld [vmem:[#allocation5 + $0xf8] sm:$0xff]
    %v88 = vld [vmem:[#allocation5 + $0x100] sm:$0xff]
    %v89 = vld [vmem:[#allocation5 + $0x108] sm:$0xff]
    %v90 = vld [vmem:[#allocation5 + $0x110] sm:$0xff]
    %v91 = vld [vmem:[#allocation5 + $0x118] sm:$0xff]
    %v92 = vld [vmem:[#allocation5 + $0x120] sm:$0xff]
    %v93 = vld [vmem:[#allocation5 + $0x128] sm:$0xff]
    %v94 = vld [vmem:[#allocation5 + $0x130] sm:$0xff]
    %v95 = vld [vmem:[#allocation5 + $0x138] sm:$0xff]
    %v96 = vld [vmem:[#allocation5 + $0x140] sm:$0xff]
    %v97 = vld [vmem:[#allocation5 + $0x148] sm:$0xff]
    %v98 = vld [vmem:[#allocation5 + $0x150] sm:$0xff]
    %v99 = vld [vmem:[#allocation5 + $0x158] sm:$0xff]
    %v100 = vld [vmem:[#allocation5 + $0x160] sm:$0xff]
    %v101 = vld [vmem:[#allocation5 + $0x168] sm:$0xff]
    %v102 = vld [vmem:[#allocation5 + $0x170] sm:$0xff]
    %v103 = vld [vmem:[#allocation5 + $0x178] sm:$0xff]
    %v104 = vld [vmem:[#allocation5 + $0x180] sm:$0xff]
    %v105 = vld [vmem:[#allocation5 + $0x188] sm:$0xff]
    %v106 = vld [vmem:[#allocation5 + $0x190] sm:$0xff]
    %v107 = vld [vmem:[#allocation5 + $0x198] sm:$0xff]
    %v108 = vld [vmem:[#allocation5 + $0x1a0] sm:$0xff]
    %v109 = vld [vmem:[#allocation5 + $0x1a8] sm:$0xff]
    %v110 = vld [vmem:[#allocation5 + $0x1b0] sm:$0xff]
    %v111 = vld [vmem:[#allocation5 + $0x1b8] sm:$0xff]
    %v112 = vld [vmem:[#allocation5 + $0x1c0] sm:$0xff]
    %v113 = vld [vmem:[#allocation5 + $0x1c8] sm:$0xff]
    %v114 = vld [vmem:[#allocation5 + $0x1d0] sm:$0xff]
    %v115 = vld [vmem:[#allocation5 + $0x1d8] sm:$0xff]
    %v116 = vld [vmem:[#allocation5 + $0x1e0] sm:$0xff]
    %v117 = vld [vmem:[#allocation5 + $0x1e8] sm:$0xff]
    %v118 = vld [vmem:[#allocation5 + $0x1f0] sm:$0xff]
    %v119 = vld [vmem:[#allocation5 + $0x1f8] sm:$0xff]
    %v120 = vld [vmem:[#allocation5 + $0x200] sm:$0xff]
    %v121 = vld [vmem:[#allocation5 + $0x208] sm:$0xff]
    %v122 = vld [vmem:[#allocation5 + $0x210] sm:$0xff]
    %v123 = vld [vmem:[#allocation5 + $0x218] sm:$0xff]
    %v124 = vld [vmem:[#allocation5 + $0x220] sm:$0xff]
    %v125 = vld [vmem:[#allocation5 + $0x228] sm:$0xff]
    %v126 = vld [vmem:[#allocation5 + $0x230] sm:$0xff]
    %v127 = vld [vmem:[#allocation5 + $0x238] sm:$0xff]
    %v128 = vld [vmem:[#allocation5 + $0x240] sm:$0xff]
    %v129 = vld [vmem:[#allocation5 + $0x248] sm:$0xff]
    %v130 = vld [vmem:[#allocation5 + $0x250] sm:$0xff]
    %v131 = vld [vmem:[#allocation5 + $0x258] sm:$0xff]
    %v132 = vld [vmem:[#allocation5 + $0x260] sm:$0xff]
    %v133 = vld [vmem:[#allocation5 + $0x268] sm:$0xff]
    %v134 = vld [vmem:[#allocation5 + $0x270] sm:$0xff]
    %v135 = vld [vmem:[#allocation5 + $0x278] sm:$0xff]
    %v136 = vld [vmem:[%s2] sm:$0x3]
    %v138 = vlaneseq
    %v139 = vshrl.u32 %v138, 7
    %v140 = vsub.s32 0, %v139
    %v141 = vrot.slane %v136, %v140
    %v142 = vlaneseq
    %v143 = vshrl.u32 %v142, 7
    %v144 = vsub.s32 1, %v143
    %v145 = vrot.slane %v136, %v144
    %v154 = vunpack.c.l.b16 %v50
    %v155 = vunpack.c.h.b16 %v50
    %v156 = vunpack.c.l.b16 %v51
    %v157 = vunpack.c.h.b16 %v51
    %v158 = vunpack.c.l.b16 %v52
    %v159 = vunpack.c.l.b16 %v53
    %v160 = vunpack.c.h.b16 %v53
    %v161 = vunpack.c.l.b16 %v54
    %v162 = vunpack.c.h.b16 %v54
    %v163 = vunpack.c.l.b16 %v55
    %v164 = vpack.c.b16 %v159, %v154
    %v165 = vpack.c.b16 %v160, %v155
    %v166 = vpack.c.b16 %v161, %v156
    %v167 = vpack.c.b16 %v162, %v157
    %v168 = vpack.c.b16 %v163, %v158
    %v254 = vunpack.c.l.b16 %v56
    %v255 = vunpack.c.h.b16 %v56
    %v256 = vunpack.c.l.b16 %v57
    %v257 = vunpack.c.h.b16 %v57
    %v258 = vunpack.c.l.b16 %v58
    %v259 = vunpack.c.h.b16 %v58
    %v260 = vunpack.c.l.b16 %v59
    %v261 = vunpack.c.h.b16 %v59
    %v262 = vunpack.c.l.b16 %v60
    %v263 = vunpack.c.h.b16 %v60
    %v264 = vunpack.c.l.b16 %v61
    %v265 = vunpack.c.h.b16 %v61
    %v266 = vunpack.c.l.b16 %v62
    %v267 = vunpack.c.h.b16 %v62
    %v268 = vunpack.c.l.b16 %v63
    %v269 = vunpack.c.h.b16 %v63
    %v270 = vunpack.c.l.b16 %v64
    %v271 = vunpack.c.h.b16 %v64
    %v272 = vunpack.c.l.b16 %v65
    %v273 = vunpack.c.h.b16 %v65
    %v274 = vunpack.c.l.b16 %v66
    %v275 = vunpack.c.h.b16 %v66
    %v276 = vunpack.c.l.b16 %v67
    %v277 = vunpack.c.h.b16 %v67
    %v278 = vunpack.c.l.b16 %v68
    %v279 = vunpack.c.h.b16 %v68
    %v280 = vunpack.c.l.b16 %v69
    %v281 = vunpack.c.h.b16 %v69
    %v282 = vunpack.c.l.b16 %v70
    %v283 = vunpack.c.h.b16 %v70
    %v284 = vunpack.c.l.b16 %v71
    %v285 = vunpack.c.h.b16 %v71
    %v286 = vunpack.c.l.b16 %v72
    %v287 = vunpack.c.h.b16 %v72
    %v288 = vunpack.c.l.b16 %v73
    %v289 = vunpack.c.h.b16 %v73
    %v290 = vunpack.c.l.b16 %v74
    %v291 = vunpack.c.h.b16 %v74
    %v292 = vunpack.c.l.b16 %v75
    %v293 = vunpack.c.h.b16 %v75
    %v294 = vunpack.c.l.b16 %v76
    %v295 = vunpack.c.h.b16 %v76
    %v296 = vunpack.c.l.b16 %v77
    %v297 = vunpack.c.h.b16 %v77
    %v298 = vunpack.c.l.b16 %v78
    %v299 = vunpack.c.h.b16 %v78
    %v300 = vunpack.c.l.b16 %v79
    %v301 = vunpack.c.h.b16 %v79
    %v302 = vunpack.c.l.b16 %v80
    %v303 = vunpack.c.h.b16 %v80
    %v304 = vunpack.c.l.b16 %v81
    %v305 = vunpack.c.h.b16 %v81
    %v306 = vunpack.c.l.b16 %v82
    %v307 = vunpack.c.h.b16 %v82
    %v308 = vunpack.c.l.b16 %v83
    %v309 = vunpack.c.h.b16 %v83
    %v310 = vunpack.c.l.b16 %v84
    %v311 = vunpack.c.h.b16 %v84
    %v312 = vunpack.c.l.b16 %v85
    %v313 = vunpack.c.h.b16 %v85
    %v314 = vunpack.c.l.b16 %v86
    %v315 = vunpack.c.h.b16 %v86
    %v316 = vunpack.c.l.b16 %v87
    %v317 = vunpack.c.h.b16 %v87
    %v318 = vunpack.c.l.b16 %v88
    %v319 = vunpack.c.h.b16 %v88
    %v320 = vunpack.c.l.b16 %v89
    %v321 = vunpack.c.h.b16 %v89
    %v322 = vunpack.c.l.b16 %v90
    %v323 = vunpack.c.h.b16 %v90
    %v324 = vunpack.c.l.b16 %v91
    %v325 = vunpack.c.h.b16 %v91
    %v326 = vunpack.c.l.b16 %v92
    %v327 = vunpack.c.h.b16 %v92
    %v328 = vunpack.c.l.b16 %v93
    %v329 = vunpack.c.h.b16 %v93
    %v330 = vunpack.c.l.b16 %v94
    %v331 = vunpack.c.h.b16 %v94
    %v332 = vunpack.c.l.b16 %v95
    %v333 = vunpack.c.h.b16 %v95
    %v334 = vunpack.c.l.b16 %v96
    %v335 = vunpack.c.h.b16 %v96
    %v336 = vunpack.c.l.b16 %v97
    %v337 = vunpack.c.h.b16 %v97
    %v338 = vunpack.c.l.b16 %v98
    %v339 = vunpack.c.h.b16 %v98
    %v340 = vunpack.c.l.b16 %v99
    %v341 = vunpack.c.h.b16 %v99
    %v342 = vunpack.c.l.b16 %v100
    %v343 = vunpack.c.h.b16 %v100
    %v344 = vunpack.c.l.b16 %v101
    %v345 = vunpack.c.h.b16 %v101
    %v346 = vunpack.c.l.b16 %v102
    %v347 = vunpack.c.h.b16 %v102
    %v348 = vunpack.c.l.b16 %v103
    %v349 = vunpack.c.h.b16 %v103
    %v350 = vunpack.c.l.b16 %v104
    %v351 = vunpack.c.h.b16 %v104
    %v352 = vunpack.c.l.b16 %v105
    %v353 = vunpack.c.h.b16 %v105
    %v354 = vunpack.c.l.b16 %v106
    %v355 = vunpack.c.h.b16 %v106
    %v356 = vunpack.c.l.b16 %v107
    %v357 = vunpack.c.h.b16 %v107
    %v358 = vunpack.c.l.b16 %v108
    %v359 = vunpack.c.h.b16 %v108
    %v360 = vunpack.c.l.b16 %v109
    %v361 = vunpack.c.h.b16 %v109
    %v362 = vunpack.c.l.b16 %v110
    %v363 = vunpack.c.h.b16 %v110
    %v364 = vunpack.c.l.b16 %v111
    %v365 = vunpack.c.h.b16 %v111
    %v366 = vunpack.c.l.b16 %v112
    %v367 = vunpack.c.h.b16 %v112
    %v368 = vunpack.c.l.b16 %v113
    %v369 = vunpack.c.h.b16 %v113
    %v370 = vunpack.c.l.b16 %v114
    %v371 = vunpack.c.h.b16 %v114
    %v372 = vunpack.c.l.b16 %v115
    %v373 = vunpack.c.h.b16 %v115
    %v374 = vunpack.c.l.b16 %v116
    %v375 = vunpack.c.h.b16 %v116
    %v376 = vunpack.c.l.b16 %v117
    %v377 = vunpack.c.h.b16 %v117
    %v378 = vunpack.c.l.b16 %v118
    %v379 = vunpack.c.h.b16 %v118
    %v380 = vunpack.c.l.b16 %v119
    %v381 = vunpack.c.h.b16 %v119
    %v382 = vunpack.c.l.b16 %v120
    %v383 = vunpack.c.h.b16 %v120
    %v384 = vunpack.c.l.b16 %v121
    %v385 = vunpack.c.h.b16 %v121
    %v386 = vunpack.c.l.b16 %v122
    %v387 = vunpack.c.h.b16 %v122
    %v388 = vunpack.c.l.b16 %v123
    %v389 = vunpack.c.h.b16 %v123
    %v390 = vunpack.c.l.b16 %v124
    %v391 = vunpack.c.h.b16 %v124
    %v392 = vunpack.c.l.b16 %v125
    %v393 = vunpack.c.h.b16 %v125
    %v394 = vunpack.c.l.b16 %v126
    %v395 = vunpack.c.h.b16 %v126
    %v396 = vunpack.c.l.b16 %v127
    %v397 = vunpack.c.h.b16 %v127
    %v398 = vunpack.c.l.b16 %v128
    %v399 = vunpack.c.h.b16 %v128
    %v400 = vunpack.c.l.b16 %v129
    %v401 = vunpack.c.h.b16 %v129
    %v402 = vunpack.c.l.b16 %v130
    %v403 = vunpack.c.h.b16 %v130
    %v404 = vunpack.c.l.b16 %v131
    %v405 = vunpack.c.h.b16 %v131
    %v406 = vunpack.c.l.b16 %v132
    %v407 = vunpack.c.h.b16 %v132
    %v408 = vunpack.c.l.b16 %v133
    %v409 = vunpack.c.h.b16 %v133
    %v410 = vunpack.c.l.b16 %v134
    %v411 = vunpack.c.h.b16 %v134
    %v412 = vunpack.c.l.b16 %v135
    %v413 = vunpack.c.h.b16 %v135
    %v414 = vpack.c.b16 %v256, %v254
    %v415 = vpack.c.b16 %v257, %v255
    %v416 = vpack.c.b16 %v260, %v258
    %v417 = vpack.c.b16 %v261, %v259
    %v418 = vpack.c.b16 %v264, %v262
    %v419 = vpack.c.b16 %v265, %v263
    %v420 = vpack.c.b16 %v268, %v266
    %v421 = vpack.c.b16 %v269, %v267
    %v422 = vpack.c.b16 %v272, %v270
    %v423 = vpack.c.b16 %v273, %v271
    %v424 = vpack.c.b16 %v276, %v274
    %v425 = vpack.c.b16 %v277, %v275
    %v426 = vpack.c.b16 %v280, %v278
    %v427 = vpack.c.b16 %v281, %v279
    %v428 = vpack.c.b16 %v284, %v282
    %v429 = vpack.c.b16 %v285, %v283
    %v430 = vpack.c.b16 %v288, %v286
    %v431 = vpack.c.b16 %v289, %v287
    %v432 = vpack.c.b16 %v292, %v290
    %v433 = vpack.c.b16 %v293, %v291
    %v434 = vpack.c.b16 %v296, %v294
    %v435 = vpack.c.b16 %v297, %v295
    %v436 = vpack.c.b16 %v300, %v298
    %v437 = vpack.c.b16 %v301, %v299
    %v438 = vpack.c.b16 %v304, %v302
    %v439 = vpack.c.b16 %v305, %v303
    %v440 = vpack.c.b16 %v308, %v306
    %v441 = vpack.c.b16 %v309, %v307
    %v442 = vpack.c.b16 %v312, %v310
    %v443 = vpack.c.b16 %v313, %v311
    %v444 = vpack.c.b16 %v316, %v314
    %v445 = vpack.c.b16 %v317, %v315
    %v446 = vpack.c.b16 %v320, %v318
    %v447 = vpack.c.b16 %v321, %v319
    %v448 = vpack.c.b16 %v324, %v322
    %v449 = vpack.c.b16 %v325, %v323
    %v450 = vpack.c.b16 %v328, %v326
    %v451 = vpack.c.b16 %v329, %v327
    %v452 = vpack.c.b16 %v332, %v330
    %v453 = vpack.c.b16 %v333, %v331
    %v454 = vpack.c.b16 %v336, %v334
    %v455 = vpack.c.b16 %v337, %v335
    %v456 = vpack.c.b16 %v340, %v338
    %v457 = vpack.c.b16 %v341, %v339
    %v458 = vpack.c.b16 %v344, %v342
    %v459 = vpack.c.b16 %v345, %v343
    %v460 = vpack.c.b16 %v348, %v346
    %v461 = vpack.c.b16 %v349, %v347
    %v462 = vpack.c.b16 %v352, %v350
    %v463 = vpack.c.b16 %v353, %v351
    %v464 = vpack.c.b16 %v356, %v354
    %v465 = vpack.c.b16 %v357, %v355
    %v466 = vpack.c.b16 %v360, %v358
    %v467 = vpack.c.b16 %v361, %v359
    %v468 = vpack.c.b16 %v364, %v362
    %v469 = vpack.c.b16 %v365, %v363
    %v470 = vpack.c.b16 %v368, %v366
    %v471 = vpack.c.b16 %v369, %v367
    %v472 = vpack.c.b16 %v372, %v370
    %v473 = vpack.c.b16 %v373, %v371
    %v474 = vpack.c.b16 %v376, %v374
    %v475 = vpack.c.b16 %v377, %v375
    %v476 = vpack.c.b16 %v380, %v378
    %v477 = vpack.c.b16 %v381, %v379
    %v478 = vpack.c.b16 %v384, %v382
    %v479 = vpack.c.b16 %v385, %v383
    %v480 = vpack.c.b16 %v388, %v386
    %v481 = vpack.c.b16 %v389, %v387
    %v482 = vpack.c.b16 %v392, %v390
    %v483 = vpack.c.b16 %v393, %v391
    %v484 = vpack.c.b16 %v396, %v394
    %v485 = vpack.c.b16 %v397, %v395
    %v486 = vpack.c.b16 %v400, %v398
    %v487 = vpack.c.b16 %v401, %v399
    %v488 = vpack.c.b16 %v404, %v402
    %v489 = vpack.c.b16 %v405, %v403
    %v490 = vpack.c.b16 %v408, %v406
    %v491 = vpack.c.b16 %v409, %v407
    %v492 = vpack.c.b16 %v412, %v410
    %v493 = vpack.c.b16 %v413, %v411
    %574 = vmatprep.subr.bf16.mxu0 %v415
    %575 = vmatpush1.bf16.msra.mxu0 %v414
    %576 = vmatprep.subr.bf16.mxu0 %v417
    %577 = vmatpush1.bf16.msra.mxu0 %v416
    %578 = vmatprep.subr.bf16.mxu0 %v419
    %579 = vmatpush1.bf16.msra.mxu0 %v418
    %580 = vmatprep.subr.bf16.mxu0 %v421
    %581 = vmatpush1.bf16.msra.mxu0 %v420
    %582 = vmatprep.subr.bf16.mxu0 %v423
    %583 = vmatpush1.bf16.msra.mxu0 %v422
    %584 = vmatprep.subr.bf16.mxu0 %v425
    %585 = vmatpush1.bf16.msra.mxu0 %v424
    %586 = vmatprep.subr.bf16.mxu0 %v427
    %587 = vmatpush1.bf16.msra.mxu0 %v426
    %588 = vmatprep.subr.bf16.mxu0 %v429
    %589 = vmatpush1.bf16.msra.mxu0 %v428
    %590 = vmatprep.subr.bf16.mxu0 %v431
    %591 = vmatpush1.bf16.msra.mxu0 %v430
    %592 = vmatprep.subr.bf16.mxu0 %v433
    %593 = vmatpush1.bf16.msra.mxu0 %v432
    %594 = vmatprep.subr.bf16.mxu0 %v435
    %595 = vmatpush1.bf16.msra.mxu0 %v434
    %596 = vmatprep.subr.bf16.mxu0 %v437
    %597 = vmatpush1.bf16.msra.mxu0 %v436
    %598 = vmatprep.subr.bf16.mxu0 %v439
    %599 = vmatpush1.bf16.msra.mxu0 %v438
    %600 = vmatprep.subr.bf16.mxu0 %v441
    %601 = vmatpush1.bf16.msra.mxu0 %v440
    %602 = vmatprep.subr.bf16.mxu0 %v443
    %603 = vmatpush1.bf16.msra.mxu0 %v442
    %604 = vmatprep.subr.bf16.mxu0 %v445
    %605 = vmatpush1.bf16.msra.mxu0 %v444
    %606 = vmatprep.mubr.bf16.mxu0 %v165
    %607 = vmatmul.mubr.bf16.gmra.mrb[0].mxu0 %v164
    %v608 = vpop.f32.mrb[0].mxu0
    %v609 = vadd.f32 %v141, %v608
    %v610 = vpop.f32.mrb[0].mxu0
    %v611 = vadd.f32 %v145, %v610
    %v612 = vpop.f32.mrb[0].mxu0
    %v613 = vadd.f32 %v141, %v612
    %v614 = vpop.f32.mrb[0].mxu0
    %v615 = vadd.f32 %v145, %v614
    %616 = vdwg.mxu0
    %617 = vmatprep.subr.bf16.mxu0 %v447
    %618 = vmatpush1.bf16.msra.mxu0 %v446
    %619 = vmatprep.subr.bf16.mxu0 %v449
    %620 = vmatpush1.bf16.msra.mxu0 %v448
    %621 = vmatprep.subr.bf16.mxu0 %v451
    %622 = vmatpush1.bf16.msra.mxu0 %v450
    %623 = vmatprep.subr.bf16.mxu0 %v453
    %624 = vmatpush1.bf16.msra.mxu0 %v452
    %625 = vmatprep.subr.bf16.mxu0 %v455
    %626 = vmatpush1.bf16.msra.mxu0 %v454
    %627 = vmatprep.subr.bf16.mxu0 %v457
    %628 = vmatpush1.bf16.msra.mxu0 %v456
    %629 = vmatprep.subr.bf16.mxu0 %v459
    %630 = vmatpush1.bf16.msra.mxu0 %v458
    %631 = vmatprep.subr.bf16.mxu0 %v461
    %632 = vmatpush1.bf16.msra.mxu0 %v460
    %633 = vmatprep.subr.bf16.mxu0 %v463
    %634 = vmatpush1.bf16.msra.mxu0 %v462
    %635 = vmatprep.subr.bf16.mxu0 %v465
    %636 = vmatpush1.bf16.msra.mxu0 %v464
    %637 = vmatprep.subr.bf16.mxu0 %v467
    %638 = vmatpush1.bf16.msra.mxu0 %v466
    %639 = vmatprep.subr.bf16.mxu0 %v469
    %640 = vmatpush1.bf16.msra.mxu0 %v468
    %641 = vmatprep.subr.bf16.mxu0 %v471
    %642 = vmatpush1.bf16.msra.mxu0 %v470
    %643 = vmatprep.subr.bf16.mxu0 %v473
    %644 = vmatpush1.bf16.msra.mxu0 %v472
    %645 = vmatprep.subr.bf16.mxu0 %v475
    %646 = vmatpush1.bf16.msra.mxu0 %v474
    %647 = vmatprep.subr.bf16.mxu0 %v477
    %648 = vmatpush1.bf16.msra.mxu0 %v476
    %649 = vmatprep.mubr.bf16.mxu0 %v167
    %650 = vmatmul.mubr.bf16.gmra.mrb[0].mxu0 %v166
    %v651 = vpop.f32.mrb[0].mxu0
    %v652 = vadd.f32 %v609, %v651
    %v653 = vpop.f32.mrb[0].mxu0
    %v654 = vadd.f32 %v611, %v653
    %v655 = vpop.f32.mrb[0].mxu0
    %v656 = vadd.f32 %v613, %v655
    %v657 = vpop.f32.mrb[0].mxu0
    %v658 = vadd.f32 %v615, %v657
    %659 = vdwg.mxu0
    %660 = vmatprep.subr.bf16.mxu0 %v479
    %661 = vmatpush1.bf16.msra.mxu0 %v478
    %662 = vmatprep.subr.bf16.mxu0 %v481
    %663 = vmatpush1.bf16.msra.mxu0 %v480
    %664 = vmatprep.subr.bf16.mxu0 %v483
    %665 = vmatpush1.bf16.msra.mxu0 %v482
    %666 = vmatprep.subr.bf16.mxu0 %v485
    %667 = vmatpush1.bf16.msra.mxu0 %v484
    %668 = vmatprep.subr.bf16.mxu0 %v487
    %669 = vmatpush1.bf16.msra.mxu0 %v486
    %670 = vmatprep.subr.bf16.mxu0 %v489
    %671 = vmatpush1.bf16.msra.mxu0 %v488
    %672 = vmatprep.subr.bf16.mxu0 %v491
    %673 = vmatpush1.bf16.msra.mxu0 %v490
    %674 = vmatprep.subr.bf16.mxu0 %v493
    %675 = vmatpush1.bf16.msra.mxu0 %v492
    %676 = vmatprep.subr.bf16.mxu0 0
    %677 = vmatpush1.bf16.msra.mxu0 0
    %678 = vmatprep.subr.bf16.mxu0 0
    %679 = vmatpush1.bf16.msra.mxu0 0
    %680 = vmatprep.subr.bf16.mxu0 0
    %681 = vmatpush1.bf16.msra.mxu0 0
    %682 = vmatprep.subr.bf16.mxu0 0
    %683 = vmatpush1.bf16.msra.mxu0 0
    %684 = vmatprep.subr.bf16.mxu0 0
    %685 = vmatpush1.bf16.msra.mxu0 0
    %686 = vmatprep.subr.bf16.mxu0 0
    %687 = vmatpush1.bf16.msra.mxu0 0
    %688 = vmatprep.subr.bf16.mxu0 0
    %689 = vmatpush1.bf16.msra.mxu0 0
    %690 = vmatprep.subr.bf16.mxu0 0
    %691 = vmatpush1.bf16.msra.mxu0 0
    %692 = vmatprep.mubr.bf16.mxu0 0
    %693 = vmatmul.mubr.bf16.gmra.mrb[0].mxu0 %v168
    %v694 = vpop.f32.mrb[0].mxu0
    %v695 = vadd.f32 %v652, %v694
    %v696 = vpop.f32.mrb[0].mxu0
    %v697 = vadd.f32 %v654, %v696
    %v698 = vpop.f32.mrb[0].mxu0
    %v699 = vadd.f32 %v656, %v698
    %v700 = vpop.f32.mrb[0].mxu0
    %v701 = vadd.f32 %v658, %v700
    %702 = vdwg.mxu0
    %v703 = vmax.f32 %v695, 0.0
    %v704 = vmax.f32 %v697, 0.0
    %v705 = vmax.f32 %v699, 0.0
    %v706 = vmax.f32 %v701, 0.0
    %v707 = vld [vmem:[%s3] sm:$0x3]
    %v709 = vlaneseq
    %v710 = vshrl.u32 %v709, 7
    %v711 = vsub.s32 0, %v710
    %v712 = vrot.slane %v707, %v711
    %v713 = vlaneseq
    %v714 = vshrl.u32 %v713, 7
    %v715 = vsub.s32 1, %v714
    %v716 = vrot.slane %v707, %v715
    %v719 = vmul.f32 %v703, %v712
    %v720 = vmul.f32 %v704, %v716
    %v721 = vmul.f32 %v705, %v712
    %v722 = vmul.f32 %v706, %v716
    %v723 = vadd.f32 %v719, %v720
    %724 = vadd.xlane.f32.xlu0 %v723
    %v725 = vpop.xlane.xlu0 %724
    %v726 = vadd.f32 %v721, %v722
    %727 = vadd.xlane.f32.xlu0 %v726
    %v728 = vpop.xlane.xlu0 %727
    %s729 = sld [smem:[#allocation2]]
    %v730 = vstv %s729
    %v731 = vadd.f32 %v725, %v730
    %v732 = vadd.f32 %v728, %v730
    %vm733 = vcmask 7168
    %734 = vst.msk [vmem:[%s5] sm:$0xff] %vm733, %v731
    %735 = vst.msk [vmem:[%s5 + $0x8] sm:$0xff] %vm733, %v732
    // Predicated region
    $region30: #{tpu_custom_call.1} parent=1 // pred_check
      _
    $region31: #{tpu_custom_call.1} parent=1 // pred_check_branch
      %737 = sbr.rel (0) target = $region33
    $region32: #{tpu_custom_call.1} parent=1 // pred_region
      _
    $region33: #{tpu_custom_call.1} parent=1 // pred_fallthru
      _
    // Predicated region
    $region34: #{tpu_custom_call.1} parent=1 // pred_check
      _
    $region35: #{tpu_custom_call.1} parent=1 // pred_check_branch
      %739 = sbr.rel (0) target = $region37
    $region36: #{tpu_custom_call.1} parent=1 // pred_region
      _
    $region37: #{tpu_custom_call.1} parent=1 // pred_fallthru
      _
    %740 = vsyncpa [#allocation4], 1
    %741 = vsyncpa [#allocation6], 1

</llo_original>
